<compile_context>
chip_gen: v7x
topology: tpu7x:2x2x1
jax: 0.10.0
libtpu: 0.0.40
codegen_flags: <defaults>
</compile_context>

<pallas_src>
import functools

import jax
import jax.numpy as jnp
from jax.experimental import pallas as pl
from jax.experimental.pallas import tpu as pltpu

IN_F = 4    # CartPole state dim
HID_F = 4   # hidden width
OUT_F = 2   # number of actions

# Offsets into the packed parameter slab (weights stored row-major as [out, in]).
_OFF_W1 = 0
_OFF_B1 = _OFF_W1 + HID_F * IN_F      # 16
_OFF_W2 = _OFF_B1 + HID_F             # 20
_OFF_B2 = _OFF_W2 + HID_F * HID_F     # 36
_OFF_W3 = _OFF_B2 + HID_F             # 40
_OFF_B3 = _OFF_W3 + OUT_F * HID_F     # 48
_SLAB_LEN = 64                        # 50 used, padded to a power of two


def _dense_rows(p_ref, rows, w_off, b_off, n_out, n_in, relu):
    """y[o] = sum_i w[o, i] * rows[i] + b[o] as VPU broadcast MACs over [1, TB] rows."""
    outs = []
    for o in range(n_out):
        acc = rows[0] * p_ref[w_off + o * n_in]
        for i in range(1, n_in):
            acc = acc + rows[i] * p_ref[w_off + o * n_in + i]
        acc = acc + p_ref[b_off + o]
        if relu:
            acc = jnp.maximum(acc, 0.0)
        outs.append(acc)
    return outs


def _mlp_kernel(p_ref, x_ref, o_ref):
    # p_ref: (64,) f32 in SMEM (all weights + biases).
    # x_ref: (IN_F, TB) f32 block -- batch on the lane axis.
    # o_ref: (OUT_F, TB) f32 block.
    x = x_ref[...]
    rows = [x[i:i + 1, :] for i in range(IN_F)]
    h = _dense_rows(p_ref, rows, _OFF_W1, _OFF_B1, HID_F, IN_F, relu=True)
    h = _dense_rows(p_ref, h, _OFF_W2, _OFF_B2, HID_F, HID_F, relu=True)
    y = _dense_rows(p_ref, h, _OFF_W3, _OFF_B3, OUT_F, HID_F, relu=False)
    # Single unmasked (OUT_F, TB) store -- lane-dense output.
    o_ref[...] = jnp.concatenate(y, axis=0)


def _round_up(n, m):
    return ((n + m - 1) // m) * m


def _pack_params(params):
    w1, b1 = params["fc1"]
    w2, b2 = params["fc2"]
    w3, b3 = params["fc3"]
    slab = jnp.concatenate([
        w1.reshape(-1), b1.reshape(-1),
        w2.reshape(-1), b2.reshape(-1),
        w3.reshape(-1), b3.reshape(-1),
    ]).astype(jnp.float32)
    return jnp.pad(slab, (0, _SLAB_LEN - slab.shape[0]))


@functools.partial(jax.jit, static_argnames=("max_tb",))
def dqn_cartpole_forward(x, params, *, max_tb=2048):
    """x: [B, 4] float32; params: dict of PyTorch-convention (w [out,in], b [out])."""
    B = x.shape[0]
    slab = _pack_params(params)

    # Batch tile: multiple of 128 (lane width), capped so per-step VMEM stays tiny
    # at large B while still amortizing the ~0.35us/step grid overhead.
    TB = min(max_tb, _round_up(max(B, 1), 128))
    B_pad = _round_up(max(B, 1), TB)

    # Layout plumbing (cheap XLA ops): feature-major [4, B_pad]; padded columns
    # are sliced off after the kernel.
    xt = jnp.transpose(x).astype(jnp.float32)
    xt = jnp.pad(xt, ((0, 0), (0, B_pad - B)))

    out = pl.pallas_call(
        _mlp_kernel,
        grid=(B_pad // TB,),
        in_specs=[
            pl.BlockSpec(memory_space=pltpu.MemorySpace.SMEM),   # packed params
            pl.BlockSpec((IN_F, TB), lambda j: (0, j)),          # activation tile
        ],
        out_specs=pl.BlockSpec((OUT_F, TB), lambda j: (0, j)),
        out_shape=jax.ShapeDtypeStruct((OUT_F, B_pad), jnp.float32),
        compiler_params=pltpu.CompilerParams(
            dimension_semantics=("parallel",)),                  # 2 TCs on v7x
    )(slab, xt)

    return jnp.transpose(out[:, :B])                             # (B, OUT_F)


def _init_params(key):
    """Deterministic init matching nn.Linear default shapes (w: [out, in], b: [out])."""
    def linear(k, out_f, in_f):
        kw, kb = jax.random.split(k)
        bound = 1.0 / jnp.sqrt(in_f)
        w = jax.random.uniform(kw, (out_f, in_f), jnp.float32, -bound, bound)
        b = jax.random.uniform(kb, (out_f,), jnp.float32, -bound, bound)
        return w, b

    k1, k2, k3 = jax.random.split(key, 3)
    return {
        "fc1": linear(k1, HID_F, IN_F),
        "fc2": linear(k2, HID_F, HID_F),
        "fc3": linear(k3, OUT_F, HID_F),
    }


def _reference_forward(x, params):
    w1, b1 = params["fc1"]
    w2, b2 = params["fc2"]
    w3, b3 = params["fc3"]
    h = jnp.maximum(x @ w1.T + b1, 0.0)
    h = jnp.maximum(h @ w2.T + b2, 0.0)
    return h @ w3.T + b3


if __name__ == "__main__":
    key = jax.random.PRNGKey(0)
    k_params, k_x1, k_x2 = jax.random.split(key, 3)
    params = _init_params(k_params)

    # Small eval-style batch (CartPole state dim = 4).
    x_small = jax.random.normal(k_x1, (8, IN_F), jnp.float32)
    out_small = jax.block_until_ready(dqn_cartpole_forward(x_small, params))
    ref_small = _reference_forward(x_small, params)
    assert out_small.shape == (8, OUT_F), out_small.shape
    assert jnp.allclose(out_small, ref_small, atol=1e-5, rtol=1e-5)

    # Ragged batch with a small tile cap to exercise the batch grid + padding path.
    x_grid = jax.random.normal(k_x2, (300, IN_F), jnp.float32)
    out_grid = jax.block_until_ready(dqn_cartpole_forward(x_grid, params, max_tb=128))
    ref_grid = _reference_forward(x_grid, params)
    assert out_grid.shape == (300, OUT_F), out_grid.shape
    assert jnp.allclose(out_grid, ref_grid, atol=1e-5, rtol=1e-5)

    print("KERNEL_OK")
</pallas_src>

<mosaic_0001>
module attributes {stable_mosaic.version = 11 : i64} {
  func.func @_mlp_kernel(%arg0: i32, %arg1: memref<64xf32, #tpu.memory_space<smem>>, %arg2: memref<4x128xf32, #tpu.memory_space<vmem>>, %arg3: memref<2x128xf32, #tpu.memory_space<vmem>>) attributes {dimension_semantics = [#tpu.dimension_semantics<parallel>], iteration_bounds = array<i64: 1>, scalar_prefetch = 0 : i64, scratch_operands = 0 : i64, tpu.core_type = #tpu.core_type<tc>, window_params = [{transform_indices = @transform_0, window_bounds = array<i64: 64>}, {transform_indices = @transform_1, window_bounds = array<i64: 4, 128>}, {transform_indices = @transform_2, window_bounds = array<i64: 2, 128>}]} {
    %c0 = arith.constant 0 : index
    %c0_0 = arith.constant 0 : index
    %0 = vector.load %arg2[%c0, %c0_0] : memref<4x128xf32, #tpu.memory_space<vmem>>, vector<4x128xf32>
    %1 = vector.extract_strided_slice %0 {offsets = [0, 0], sizes = [1, 128], strides = [1, 1]} : vector<4x128xf32> to vector<1x128xf32>
    %2 = vector.extract_strided_slice %0 {offsets = [1, 0], sizes = [1, 128], strides = [1, 1]} : vector<4x128xf32> to vector<1x128xf32>
    %3 = vector.extract_strided_slice %0 {offsets = [2, 0], sizes = [1, 128], strides = [1, 1]} : vector<4x128xf32> to vector<1x128xf32>
    %4 = vector.extract_strided_slice %0 {offsets = [3, 0], sizes = [1, 128], strides = [1, 1]} : vector<4x128xf32> to vector<1x128xf32>
    %c0_1 = arith.constant 0 : index
    %5 = memref.load %arg1[%c0_1] : memref<64xf32, #tpu.memory_space<smem>>
    %6 = vector.broadcast %5 : f32 to vector<1x128xf32>
    %7 = arith.mulf %1, %6 : vector<1x128xf32>
    %c1 = arith.constant 1 : index
    %8 = memref.load %arg1[%c1] : memref<64xf32, #tpu.memory_space<smem>>
    %9 = vector.broadcast %8 : f32 to vector<1x128xf32>
    %10 = arith.mulf %2, %9 : vector<1x128xf32>
    %11 = arith.addf %7, %10 : vector<1x128xf32>
    %c2 = arith.constant 2 : index
    %12 = memref.load %arg1[%c2] : memref<64xf32, #tpu.memory_space<smem>>
    %13 = vector.broadcast %12 : f32 to vector<1x128xf32>
    %14 = arith.mulf %3, %13 : vector<1x128xf32>
    %15 = arith.addf %11, %14 : vector<1x128xf32>
    %c3 = arith.constant 3 : index
    %16 = memref.load %arg1[%c3] : memref<64xf32, #tpu.memory_space<smem>>
    %17 = vector.broadcast %16 : f32 to vector<1x128xf32>
    %18 = arith.mulf %4, %17 : vector<1x128xf32>
    %19 = arith.addf %15, %18 : vector<1x128xf32>
    %c16 = arith.constant 16 : index
    %20 = memref.load %arg1[%c16] : memref<64xf32, #tpu.memory_space<smem>>
    %21 = vector.broadcast %20 : f32 to vector<1x128xf32>
    %22 = arith.addf %19, %21 : vector<1x128xf32>
    %cst = arith.constant 0.000000e+00 : f32
    %23 = vector.broadcast %cst : f32 to vector<1x128xf32>
    %24 = arith.maximumf %22, %23 : vector<1x128xf32>
    %c4 = arith.constant 4 : index
    %25 = memref.load %arg1[%c4] : memref<64xf32, #tpu.memory_space<smem>>
    %26 = vector.broadcast %25 : f32 to vector<1x128xf32>
    %27 = arith.mulf %1, %26 : vector<1x128xf32>
    %c5 = arith.constant 5 : index
    %28 = memref.load %arg1[%c5] : memref<64xf32, #tpu.memory_space<smem>>
    %29 = vector.broadcast %28 : f32 to vector<1x128xf32>
    %30 = arith.mulf %2, %29 : vector<1x128xf32>
    %31 = arith.addf %27, %30 : vector<1x128xf32>
    %c6 = arith.constant 6 : index
    %32 = memref.load %arg1[%c6] : memref<64xf32, #tpu.memory_space<smem>>
    %33 = vector.broadcast %32 : f32 to vector<1x128xf32>
    %34 = arith.mulf %3, %33 : vector<1x128xf32>
    %35 = arith.addf %31, %34 : vector<1x128xf32>
    %c7 = arith.constant 7 : index
    %36 = memref.load %arg1[%c7] : memref<64xf32, #tpu.memory_space<smem>>
    %37 = vector.broadcast %36 : f32 to vector<1x128xf32>
    %38 = arith.mulf %4, %37 : vector<1x128xf32>
    %39 = arith.addf %35, %38 : vector<1x128xf32>
    %c17 = arith.constant 17 : index
    %40 = memref.load %arg1[%c17] : memref<64xf32, #tpu.memory_space<smem>>
    %41 = vector.broadcast %40 : f32 to vector<1x128xf32>
    %42 = arith.addf %39, %41 : vector<1x128xf32>
    %cst_2 = arith.constant 0.000000e+00 : f32
    %43 = vector.broadcast %cst_2 : f32 to vector<1x128xf32>
    %44 = arith.maximumf %42, %43 : vector<1x128xf32>
    %c8 = arith.constant 8 : index
    %45 = memref.load %arg1[%c8] : memref<64xf32, #tpu.memory_space<smem>>
    %46 = vector.broadcast %45 : f32 to vector<1x128xf32>
    %47 = arith.mulf %1, %46 : vector<1x128xf32>
    %c9 = arith.constant 9 : index
    %48 = memref.load %arg1[%c9] : memref<64xf32, #tpu.memory_space<smem>>
    %49 = vector.broadcast %48 : f32 to vector<1x128xf32>
    %50 = arith.mulf %2, %49 : vector<1x128xf32>
    %51 = arith.addf %47, %50 : vector<1x128xf32>
    %c10 = arith.constant 10 : index
    %52 = memref.load %arg1[%c10] : memref<64xf32, #tpu.memory_space<smem>>
    %53 = vector.broadcast %52 : f32 to vector<1x128xf32>
    %54 = arith.mulf %3, %53 : vector<1x128xf32>
    %55 = arith.addf %51, %54 : vector<1x128xf32>
    %c11 = arith.constant 11 : index
    %56 = memref.load %arg1[%c11] : memref<64xf32, #tpu.memory_space<smem>>
    %57 = vector.broadcast %56 : f32 to vector<1x128xf32>
    %58 = arith.mulf %4, %57 : vector<1x128xf32>
    %59 = arith.addf %55, %58 : vector<1x128xf32>
    %c18 = arith.constant 18 : index
    %60 = memref.load %arg1[%c18] : memref<64xf32, #tpu.memory_space<smem>>
    %61 = vector.broadcast %60 : f32 to vector<1x128xf32>
    %62 = arith.addf %59, %61 : vector<1x128xf32>
    %cst_3 = arith.constant 0.000000e+00 : f32
    %63 = vector.broadcast %cst_3 : f32 to vector<1x128xf32>
    %64 = arith.maximumf %62, %63 : vector<1x128xf32>
    %c12 = arith.constant 12 : index
    %65 = memref.load %arg1[%c12] : memref<64xf32, #tpu.memory_space<smem>>
    %66 = vector.broadcast %65 : f32 to vector<1x128xf32>
    %67 = arith.mulf %1, %66 : vector<1x128xf32>
    %c13 = arith.constant 13 : index
    %68 = memref.load %arg1[%c13] : memref<64xf32, #tpu.memory_space<smem>>
    %69 = vector.broadcast %68 : f32 to vector<1x128xf32>
    %70 = arith.mulf %2, %69 : vector<1x128xf32>
    %71 = arith.addf %67, %70 : vector<1x128xf32>
    %c14 = arith.constant 14 : index
    %72 = memref.load %arg1[%c14] : memref<64xf32, #tpu.memory_space<smem>>
    %73 = vector.broadcast %72 : f32 to vector<1x128xf32>
    %74 = arith.mulf %3, %73 : vector<1x128xf32>
    %75 = arith.addf %71, %74 : vector<1x128xf32>
    %c15 = arith.constant 15 : index
    %76 = memref.load %arg1[%c15] : memref<64xf32, #tpu.memory_space<smem>>
    %77 = vector.broadcast %76 : f32 to vector<1x128xf32>
    %78 = arith.mulf %4, %77 : vector<1x128xf32>
    %79 = arith.addf %75, %78 : vector<1x128xf32>
    %c19 = arith.constant 19 : index
    %80 = memref.load %arg1[%c19] : memref<64xf32, #tpu.memory_space<smem>>
    %81 = vector.broadcast %80 : f32 to vector<1x128xf32>
    %82 = arith.addf %79, %81 : vector<1x128xf32>
    %cst_4 = arith.constant 0.000000e+00 : f32
    %83 = vector.broadcast %cst_4 : f32 to vector<1x128xf32>
    %84 = arith.maximumf %82, %83 : vector<1x128xf32>
    %c20 = arith.constant 20 : index
    %85 = memref.load %arg1[%c20] : memref<64xf32, #tpu.memory_space<smem>>
    %86 = vector.broadcast %85 : f32 to vector<1x128xf32>
    %87 = arith.mulf %24, %86 : vector<1x128xf32>
    %c21 = arith.constant 21 : index
    %88 = memref.load %arg1[%c21] : memref<64xf32, #tpu.memory_space<smem>>
    %89 = vector.broadcast %88 : f32 to vector<1x128xf32>
    %90 = arith.mulf %44, %89 : vector<1x128xf32>
    %91 = arith.addf %87, %90 : vector<1x128xf32>
    %c22 = arith.constant 22 : index
    %92 = memref.load %arg1[%c22] : memref<64xf32, #tpu.memory_space<smem>>
    %93 = vector.broadcast %92 : f32 to vector<1x128xf32>
    %94 = arith.mulf %64, %93 : vector<1x128xf32>
    %95 = arith.addf %91, %94 : vector<1x128xf32>
    %c23 = arith.constant 23 : index
    %96 = memref.load %arg1[%c23] : memref<64xf32, #tpu.memory_space<smem>>
    %97 = vector.broadcast %96 : f32 to vector<1x128xf32>
    %98 = arith.mulf %84, %97 : vector<1x128xf32>
    %99 = arith.addf %95, %98 : vector<1x128xf32>
    %c36 = arith.constant 36 : index
    %100 = memref.load %arg1[%c36] : memref<64xf32, #tpu.memory_space<smem>>
    %101 = vector.broadcast %100 : f32 to vector<1x128xf32>
    %102 = arith.addf %99, %101 : vector<1x128xf32>
    %cst_5 = arith.constant 0.000000e+00 : f32
    %103 = vector.broadcast %cst_5 : f32 to vector<1x128xf32>
    %104 = arith.maximumf %102, %103 : vector<1x128xf32>
    %c24 = arith.constant 24 : index
    %105 = memref.load %arg1[%c24] : memref<64xf32, #tpu.memory_space<smem>>
    %106 = vector.broadcast %105 : f32 to vector<1x128xf32>
    %107 = arith.mulf %24, %106 : vector<1x128xf32>
    %c25 = arith.constant 25 : index
    %108 = memref.load %arg1[%c25] : memref<64xf32, #tpu.memory_space<smem>>
    %109 = vector.broadcast %108 : f32 to vector<1x128xf32>
    %110 = arith.mulf %44, %109 : vector<1x128xf32>
    %111 = arith.addf %107, %110 : vector<1x128xf32>
    %c26 = arith.constant 26 : index
    %112 = memref.load %arg1[%c26] : memref<64xf32, #tpu.memory_space<smem>>
    %113 = vector.broadcast %112 : f32 to vector<1x128xf32>
    %114 = arith.mulf %64, %113 : vector<1x128xf32>
    %115 = arith.addf %111, %114 : vector<1x128xf32>
    %c27 = arith.constant 27 : index
    %116 = memref.load %arg1[%c27] : memref<64xf32, #tpu.memory_space<smem>>
    %117 = vector.broadcast %116 : f32 to vector<1x128xf32>
    %118 = arith.mulf %84, %117 : vector<1x128xf32>
    %119 = arith.addf %115, %118 : vector<1x128xf32>
    %c37 = arith.constant 37 : index
    %120 = memref.load %arg1[%c37] : memref<64xf32, #tpu.memory_space<smem>>
    %121 = vector.broadcast %120 : f32 to vector<1x128xf32>
    %122 = arith.addf %119, %121 : vector<1x128xf32>
    %cst_6 = arith.constant 0.000000e+00 : f32
    %123 = vector.broadcast %cst_6 : f32 to vector<1x128xf32>
    %124 = arith.maximumf %122, %123 : vector<1x128xf32>
    %c28 = arith.constant 28 : index
    %125 = memref.load %arg1[%c28] : memref<64xf32, #tpu.memory_space<smem>>
    %126 = vector.broadcast %125 : f32 to vector<1x128xf32>
    %127 = arith.mulf %24, %126 : vector<1x128xf32>
    %c29 = arith.constant 29 : index
    %128 = memref.load %arg1[%c29] : memref<64xf32, #tpu.memory_space<smem>>
    %129 = vector.broadcast %128 : f32 to vector<1x128xf32>
    %130 = arith.mulf %44, %129 : vector<1x128xf32>
    %131 = arith.addf %127, %130 : vector<1x128xf32>
    %c30 = arith.constant 30 : index
    %132 = memref.load %arg1[%c30] : memref<64xf32, #tpu.memory_space<smem>>
    %133 = vector.broadcast %132 : f32 to vector<1x128xf32>
    %134 = arith.mulf %64, %133 : vector<1x128xf32>
    %135 = arith.addf %131, %134 : vector<1x128xf32>
    %c31 = arith.constant 31 : index
    %136 = memref.load %arg1[%c31] : memref<64xf32, #tpu.memory_space<smem>>
    %137 = vector.broadcast %136 : f32 to vector<1x128xf32>
    %138 = arith.mulf %84, %137 : vector<1x128xf32>
    %139 = arith.addf %135, %138 : vector<1x128xf32>
    %c38 = arith.constant 38 : index
    %140 = memref.load %arg1[%c38] : memref<64xf32, #tpu.memory_space<smem>>
    %141 = vector.broadcast %140 : f32 to vector<1x128xf32>
    %142 = arith.addf %139, %141 : vector<1x128xf32>
    %cst_7 = arith.constant 0.000000e+00 : f32
    %143 = vector.broadcast %cst_7 : f32 to vector<1x128xf32>
    %144 = arith.maximumf %142, %143 : vector<1x128xf32>
    %c32 = arith.constant 32 : index
    %145 = memref.load %arg1[%c32] : memref<64xf32, #tpu.memory_space<smem>>
    %146 = vector.broadcast %145 : f32 to vector<1x128xf32>
    %147 = arith.mulf %24, %146 : vector<1x128xf32>
    %c33 = arith.constant 33 : index
    %148 = memref.load %arg1[%c33] : memref<64xf32, #tpu.memory_space<smem>>
    %149 = vector.broadcast %148 : f32 to vector<1x128xf32>
    %150 = arith.mulf %44, %149 : vector<1x128xf32>
    %151 = arith.addf %147, %150 : vector<1x128xf32>
    %c34 = arith.constant 34 : index
    %152 = memref.load %arg1[%c34] : memref<64xf32, #tpu.memory_space<smem>>
    %153 = vector.broadcast %152 : f32 to vector<1x128xf32>
    %154 = arith.mulf %64, %153 : vector<1x128xf32>
    %155 = arith.addf %151, %154 : vector<1x128xf32>
    %c35 = arith.constant 35 : index
    %156 = memref.load %arg1[%c35] : memref<64xf32, #tpu.memory_space<smem>>
    %157 = vector.broadcast %156 : f32 to vector<1x128xf32>
    %158 = arith.mulf %84, %157 : vector<1x128xf32>
    %159 = arith.addf %155, %158 : vector<1x128xf32>
    %c39 = arith.constant 39 : index
    %160 = memref.load %arg1[%c39] : memref<64xf32, #tpu.memory_space<smem>>
    %161 = vector.broadcast %160 : f32 to vector<1x128xf32>
    %162 = arith.addf %159, %161 : vector<1x128xf32>
    %cst_8 = arith.constant 0.000000e+00 : f32
    %163 = vector.broadcast %cst_8 : f32 to vector<1x128xf32>
    %164 = arith.maximumf %162, %163 : vector<1x128xf32>
    %c40 = arith.constant 40 : index
    %165 = memref.load %arg1[%c40] : memref<64xf32, #tpu.memory_space<smem>>
    %166 = vector.broadcast %165 : f32 to vector<1x128xf32>
    %167 = arith.mulf %104, %166 : vector<1x128xf32>
    %c41 = arith.constant 41 : index
    %168 = memref.load %arg1[%c41] : memref<64xf32, #tpu.memory_space<smem>>
    %169 = vector.broadcast %168 : f32 to vector<1x128xf32>
    %170 = arith.mulf %124, %169 : vector<1x128xf32>
    %171 = arith.addf %167, %170 : vector<1x128xf32>
    %c42 = arith.constant 42 : index
    %172 = memref.load %arg1[%c42] : memref<64xf32, #tpu.memory_space<smem>>
    %173 = vector.broadcast %172 : f32 to vector<1x128xf32>
    %174 = arith.mulf %144, %173 : vector<1x128xf32>
    %175 = arith.addf %171, %174 : vector<1x128xf32>
    %c43 = arith.constant 43 : index
    %176 = memref.load %arg1[%c43] : memref<64xf32, #tpu.memory_space<smem>>
    %177 = vector.broadcast %176 : f32 to vector<1x128xf32>
    %178 = arith.mulf %164, %177 : vector<1x128xf32>
    %179 = arith.addf %175, %178 : vector<1x128xf32>
    %c48 = arith.constant 48 : index
    %180 = memref.load %arg1[%c48] : memref<64xf32, #tpu.memory_space<smem>>
    %181 = vector.broadcast %180 : f32 to vector<1x128xf32>
    %182 = arith.addf %179, %181 : vector<1x128xf32>
    %c44 = arith.constant 44 : index
    %183 = memref.load %arg1[%c44] : memref<64xf32, #tpu.memory_space<smem>>
    %184 = vector.broadcast %183 : f32 to vector<1x128xf32>
    %185 = arith.mulf %104, %184 : vector<1x128xf32>
    %c45 = arith.constant 45 : index
    %186 = memref.load %arg1[%c45] : memref<64xf32, #tpu.memory_space<smem>>
    %187 = vector.broadcast %186 : f32 to vector<1x128xf32>
    %188 = arith.mulf %124, %187 : vector<1x128xf32>
    %189 = arith.addf %185, %188 : vector<1x128xf32>
    %c46 = arith.constant 46 : index
    %190 = memref.load %arg1[%c46] : memref<64xf32, #tpu.memory_space<smem>>
    %191 = vector.broadcast %190 : f32 to vector<1x128xf32>
    %192 = arith.mulf %144, %191 : vector<1x128xf32>
    %193 = arith.addf %189, %192 : vector<1x128xf32>
    %c47 = arith.constant 47 : index
    %194 = memref.load %arg1[%c47] : memref<64xf32, #tpu.memory_space<smem>>
    %195 = vector.broadcast %194 : f32 to vector<1x128xf32>
    %196 = arith.mulf %164, %195 : vector<1x128xf32>
    %197 = arith.addf %193, %196 : vector<1x128xf32>
    %c49 = arith.constant 49 : index
    %198 = memref.load %arg1[%c49] : memref<64xf32, #tpu.memory_space<smem>>
    %199 = vector.broadcast %198 : f32 to vector<1x128xf32>
    %200 = arith.addf %197, %199 : vector<1x128xf32>
    %201 = tpu.concatenate %182, %200 in 0 : vector<1x128xf32>, vector<1x128xf32> -> vector<2x128xf32>
    %c0_9 = arith.constant 0 : index
    %c0_10 = arith.constant 0 : index
    %202 = vector.load %arg3[%c0_9, %c0_10] : memref<2x128xf32, #tpu.memory_space<vmem>>, vector<2x128xf32>
    tpu.vector_store %arg3[%c0_9, %c0_10], %201 {strides = array<i32>} : memref<2x128xf32, #tpu.memory_space<vmem>>, vector<2x128xf32>,
    return
  }
  func.func @transform_0(%arg0: i32) -> i32 {
    %c0_i32 = arith.constant 0 : i32
    %c0_i32_0 = arith.constant 0 : i32
    return %c0_i32 : i32
  }
  func.func @transform_1(%arg0: i32) -> (i32, i32) {
    %c0_i32 = arith.constant 0 : i32
    %c0_i32_0 = arith.constant 0 : i32
    return %c0_i32, %arg0 : i32, i32
  }
  func.func @transform_2(%arg0: i32) -> (i32, i32) {
    %c0_i32 = arith.constant 0 : i32
    %c0_i32_0 = arith.constant 0 : i32
    return %c0_i32, %arg0 : i32, i32
  }
}

</mosaic_0001>

<llo_original>
// kernel: dqn_cartpole_forward.1
$region0: #{dqn_cartpole_forward.1}
  #allocation0 [shape = 'u32[]', space=smem, size = 0x4, offset = 0x4, fixed_abs, tag = 'smem constant byte address 0x4 - core index']
  #allocation1 [shape = 'u32[144,128]{1,0:T(1,128)}', space=vmem, size = 0x12000, scoped, tag = 'internal scratch']
  %s0 = inlined_call_operand.vmem [shape: f32[64], index: 0, kind: input, shape index: {}]
  %s1 = inlined_call_operand.vmem [shape: f32[4,128], index: 1, kind: input, shape index: {}]
  %s2 = inlined_call_operand.vmem [shape: f32[2,128], index: 2, kind: output, shape index: {}]
  %s3 = sld [smem:[#allocation0]]
  $region22: #{dqn_cartpole_forward.1} parent=0
    _
  %s5 = ssub.s32 1, %s3
  %s6 = scalar_select 0, %s5, %s3
  $region1: #{dqn_cartpole_forward.1} parent=0
    #allocation2 [shape = 'u8[512]{0}', space=smem, size = 0x200, scoped, tag = 'input window, operand 0, single buffered']
    #allocation3 [shape = 's32[1]{0}', space=sflag, size = 0x4, scoped, tag = 'scoped memory for dqn_cartpole_forward.1']
    %7 = vsyncpa [#allocation3], 0
    // Predicated region
    $region2: #{dqn_cartpole_forward.1} parent=1 // pred_check
      _
    $region3: #{dqn_cartpole_forward.1} parent=1 // pred_check_branch
      %9 = sbr.rel (0) target = $region5
    $region4: #{dqn_cartpole_forward.1} parent=1 // pred_region
      %s11 = ssub.s32 16, 16
      %12 = vsyncadd [#allocation3], %s11
      %s14 = sshll.u32 %s0, 4
      %s15 = int_to_ptr.vmem [resolvable:$true] %s14
      %17 = dma.vmem_to_smem %s15, 16, [#allocation2], [#allocation3]
    $region5: #{dqn_cartpole_forward.1} parent=1 // pred_fallthru
      _
    // Predicated region
    $region6: #{dqn_cartpole_forward.1} parent=1 // pred_check
      _
    $region7: #{dqn_cartpole_forward.1} parent=1 // pred_check_branch
      %19 = sbr.rel (0) target = $region9
    $region8: #{dqn_cartpole_forward.1} parent=1 // pred_region
      _
    $region9: #{dqn_cartpole_forward.1} parent=1 // pred_fallthru
      _
    // Predicated region
    $region10: #{dqn_cartpole_forward.1} parent=1 // pred_check
      _
    $region11: #{dqn_cartpole_forward.1} parent=1 // pred_check_branch
      %21 = sbr.rel (0) target = $region13
    $region12: #{dqn_cartpole_forward.1} parent=1 // pred_region
      %22 = dma.done [#allocation3], 16
    $region13: #{dqn_cartpole_forward.1} parent=1 // pred_fallthru
      _
    %23 = sfence
    %v24 = vld [vmem:[%s1] sm:$0xf]
    %s25 = sld [smem:[#allocation2]]
    %v26 = vstv %s25
    %v27 = vmul.f32 %v24, %v26
    %s28 = sld [smem:[#allocation2 + $0x1]]
    %v29 = vstv %s28
    %v30 = vmul.f32 %v24, %v29
    %v32 = vrot.slane %v30, 1
    %v34 = vadd.f32 %v27, %v32
    %s35 = sld [smem:[#allocation2 + $0x2]]
    %v36 = vstv %s35
    %v37 = vmul.f32 %v24, %v36
    %v39 = vrot.slane %v37, 2
    %v41 = vadd.f32 %v34, %v39
    %s42 = sld [smem:[#allocation2 + $0x3]]
    %v43 = vstv %s42
    %v44 = vmul.f32 %v24, %v43
    %v46 = vrot.slane %v44, 3
    %v48 = vadd.f32 %v41, %v46
    %s49 = sld [smem:[#allocation2 + $0x10]]
    %v50 = vstv %s49
    %v51 = vadd.f32 %v48, %v50
    %v52 = vmax.f32 %v51, 0.0
    %s53 = sld [smem:[#allocation2 + $0x4]]
    %v54 = vstv %s53
    %v55 = vmul.f32 %v24, %v54
    %s56 = sld [smem:[#allocation2 + $0x5]]
    %v57 = vstv %s56
    %v58 = vmul.f32 %v24, %v57
    %v60 = vrot.slane %v58, 1
    %v62 = vadd.f32 %v55, %v60
    %s63 = sld [smem:[#allocation2 + $0x6]]
    %v64 = vstv %s63
    %v65 = vmul.f32 %v24, %v64
    %v67 = vrot.slane %v65, 2
    %v69 = vadd.f32 %v62, %v67
    %s70 = sld [smem:[#allocation2 + $0x7]]
    %v71 = vstv %s70
    %v72 = vmul.f32 %v24, %v71
    %v74 = vrot.slane %v72, 3
    %v76 = vadd.f32 %v69, %v74
    %s77 = sld [smem:[#allocation2 + $0x11]]
    %v78 = vstv %s77
    %v79 = vadd.f32 %v76, %v78
    %v80 = vmax.f32 %v79, 0.0
    %s81 = sld [smem:[#allocation2 + $0x8]]
    %v82 = vstv %s81
    %v83 = vmul.f32 %v24, %v82
    %s84 = sld [smem:[#allocation2 + $0x9]]
    %v85 = vstv %s84
    %v86 = vmul.f32 %v24, %v85
    %v88 = vrot.slane %v86, 1
    %v90 = vadd.f32 %v83, %v88
    %s91 = sld [smem:[#allocation2 + $0xa]]
    %v92 = vstv %s91
    %v93 = vmul.f32 %v24, %v92
    %v95 = vrot.slane %v93, 2
    %v97 = vadd.f32 %v90, %v95
    %s98 = sld [smem:[#allocation2 + $0xb]]
    %v99 = vstv %s98
    %v100 = vmul.f32 %v24, %v99
    %v102 = vrot.slane %v100, 3
    %v104 = vadd.f32 %v97, %v102
    %s105 = sld [smem:[#allocation2 + $0x12]]
    %v106 = vstv %s105
    %v107 = vadd.f32 %v104, %v106
    %v108 = vmax.f32 %v107, 0.0
    %s109 = sld [smem:[#allocation2 + $0xc]]
    %v110 = vstv %s109
    %v111 = vmul.f32 %v24, %v110
    %s112 = sld [smem:[#allocation2 + $0xd]]
    %v113 = vstv %s112
    %v114 = vmul.f32 %v24, %v113
    %v116 = vrot.slane %v114, 1
    %v118 = vadd.f32 %v111, %v116
    %s119 = sld [smem:[#allocation2 + $0xe]]
    %v120 = vstv %s119
    %v121 = vmul.f32 %v24, %v120
    %v123 = vrot.slane %v121, 2
    %v125 = vadd.f32 %v118, %v123
    %s126 = sld [smem:[#allocation2 + $0xf]]
    %v127 = vstv %s126
    %v128 = vmul.f32 %v24, %v127
    %v130 = vrot.slane %v128, 3
    %v132 = vadd.f32 %v125, %v130
    %s133 = sld [smem:[#allocation2 + $0x13]]
    %v134 = vstv %s133
    %v135 = vadd.f32 %v132, %v134
    %v136 = vmax.f32 %v135, 0.0
    %s137 = sld [smem:[#allocation2 + $0x14]]
    %v138 = vstv %s137
    %v139 = vmul.f32 %v52, %v138
    %s140 = sld [smem:[#allocation2 + $0x15]]
    %v141 = vstv %s140
    %v142 = vmul.f32 %v80, %v141
    %v143 = vadd.f32 %v139, %v142
    %s144 = sld [smem:[#allocation2 + $0x16]]
    %v145 = vstv %s144
    %v146 = vmul.f32 %v108, %v145
    %v147 = vadd.f32 %v143, %v146
    %s148 = sld [smem:[#allocation2 + $0x17]]
    %v149 = vstv %s148
    %v150 = vmul.f32 %v136, %v149
    %v151 = vadd.f32 %v147, %v150
    %s152 = sld [smem:[#allocation2 + $0x24]]
    %v153 = vstv %s152
    %v154 = vadd.f32 %v151, %v153
    %v155 = vmax.f32 %v154, 0.0
    %s156 = sld [smem:[#allocation2 + $0x18]]
    %v157 = vstv %s156
    %v158 = vmul.f32 %v52, %v157
    %s159 = sld [smem:[#allocation2 + $0x19]]
    %v160 = vstv %s159
    %v161 = vmul.f32 %v80, %v160
    %v162 = vadd.f32 %v158, %v161
    %s163 = sld [smem:[#allocation2 + $0x1a]]
    %v164 = vstv %s163
    %v165 = vmul.f32 %v108, %v164
    %v166 = vadd.f32 %v162, %v165
    %s167 = sld [smem:[#allocation2 + $0x1b]]
    %v168 = vstv %s167
    %v169 = vmul.f32 %v136, %v168
    %v170 = vadd.f32 %v166, %v169
    %s171 = sld [smem:[#allocation2 + $0x25]]
    %v172 = vstv %s171
    %v173 = vadd.f32 %v170, %v172
    %v174 = vmax.f32 %v173, 0.0
    %s175 = sld [smem:[#allocation2 + $0x1c]]
    %v176 = vstv %s175
    %v177 = vmul.f32 %v52, %v176
    %s178 = sld [smem:[#allocation2 + $0x1d]]
    %v179 = vstv %s178
    %v180 = vmul.f32 %v80, %v179
    %v181 = vadd.f32 %v177, %v180
    %s182 = sld [smem:[#allocation2 + $0x1e]]
    %v183 = vstv %s182
    %v184 = vmul.f32 %v108, %v183
    %v185 = vadd.f32 %v181, %v184
    %s186 = sld [smem:[#allocation2 + $0x1f]]
    %v187 = vstv %s186
    %v188 = vmul.f32 %v136, %v187
    %v189 = vadd.f32 %v185, %v188
    %s190 = sld [smem:[#allocation2 + $0x26]]
    %v191 = vstv %s190
    %v192 = vadd.f32 %v189, %v191
    %v193 = vmax.f32 %v192, 0.0
    %s194 = sld [smem:[#allocation2 + $0x20]]
    %v195 = vstv %s194
    %v196 = vmul.f32 %v52, %v195
    %s197 = sld [smem:[#allocation2 + $0x21]]
    %v198 = vstv %s197
    %v199 = vmul.f32 %v80, %v198
    %v200 = vadd.f32 %v196, %v199
    %s201 = sld [smem:[#allocation2 + $0x22]]
    %v202 = vstv %s201
    %v203 = vmul.f32 %v108, %v202
    %v204 = vadd.f32 %v200, %v203
    %s205 = sld [smem:[#allocation2 + $0x23]]
    %v206 = vstv %s205
    %v207 = vmul.f32 %v136, %v206
    %v208 = vadd.f32 %v204, %v207
    %s209 = sld [smem:[#allocation2 + $0x27]]
    %v210 = vstv %s209
    %v211 = vadd.f32 %v208, %v210
    %v212 = vmax.f32 %v211, 0.0
    %s213 = sld [smem:[#allocation2 + $0x28]]
    %v214 = vstv %s213
    %v215 = vmul.f32 %v155, %v214
    %s216 = sld [smem:[#allocation2 + $0x29]]
    %v217 = vstv %s216
    %v218 = vmul.f32 %v174, %v217
    %v219 = vadd.f32 %v215, %v218
    %s220 = sld [smem:[#allocation2 + $0x2a]]
    %v221 = vstv %s220
    %v222 = vmul.f32 %v193, %v221
    %v223 = vadd.f32 %v219, %v222
    %s224 = sld [smem:[#allocation2 + $0x2b]]
    %v225 = vstv %s224
    %v226 = vmul.f32 %v212, %v225
    %v227 = vadd.f32 %v223, %v226
    %s228 = sld [smem:[#allocation2 + $0x30]]
    %v229 = vstv %s228
    %v230 = vadd.f32 %v227, %v229
    %s231 = sld [smem:[#allocation2 + $0x2c]]
    %v232 = vstv %s231
    %v233 = vmul.f32 %v155, %v232
    %s234 = sld [smem:[#allocation2 + $0x2d]]
    %v235 = vstv %s234
    %v236 = vmul.f32 %v174, %v235
    %v237 = vadd.f32 %v233, %v236
    %s238 = sld [smem:[#allocation2 + $0x2e]]
    %v239 = vstv %s238
    %v240 = vmul.f32 %v193, %v239
    %v241 = vadd.f32 %v237, %v240
    %s242 = sld [smem:[#allocation2 + $0x2f]]
    %v243 = vstv %s242
    %v244 = vmul.f32 %v212, %v243
    %v245 = vadd.f32 %v241, %v244
    %s246 = sld [smem:[#allocation2 + $0x31]]
    %v247 = vstv %s246
    %v248 = vadd.f32 %v245, %v247
    %v250 = vrot.slane %v248, 7
    %vm252 = vcmask 1040384
    %v253 = vsel %vm252, %v230, %v250
    %254 = vst [vmem:[%s2] sm:$0x3] %v253
    // Predicated region
    $region14: #{dqn_cartpole_forward.1} parent=1 // pred_check
      _
    $region15: #{dqn_cartpole_forward.1} parent=1 // pred_check_branch
      %256 = sbr.rel (0) target = $region17
    $region16: #{dqn_cartpole_forward.1} parent=1 // pred_region
      _
    $region17: #{dqn_cartpole_forward.1} parent=1 // pred_fallthru
      _
    // Predicated region
    $region18: #{dqn_cartpole_forward.1} parent=1 // pred_check
      _
    $region19: #{dqn_cartpole_forward.1} parent=1 // pred_check_branch
      %258 = sbr.rel (0) target = $region21
    $region20: #{dqn_cartpole_forward.1} parent=1 // pred_region
      _
    $region21: #{dqn_cartpole_forward.1} parent=1 // pred_fallthru
      _
    %259 = vsyncpa [#allocation3], 1

</llo_original>
